<compile_context>
chip_gen: v5e
topology: v5e:2x2
jax: 0.10.0
libtpu: 0.0.40
codegen_flags: <defaults>
</compile_context>

<pallas_src>
import jax
import jax.numpy as jnp
from jax import lax
from jax.experimental import pallas as pl
from jax.experimental.pallas import tpu as pltpu


def _round_up(a: int, b: int) -> int:
    return pl.cdiv(a, b) * b


# ----------------------------------------------------------------------------
# Kernel: one (tm, tc) output tile.
# ----------------------------------------------------------------------------
def _cosine_kernel(x_ref, w_ref, o_ref):
    x = x_ref[...]                                   # (tm, D)  bf16 (or f32)
    # Row sum-of-squares in f32 regardless of storage dtype (upcast only here).
    xf = x.astype(jnp.float32)
    row_ss = jnp.sum(xf * xf, axis=1, keepdims=True)             # (tm, 1)
    # Zero-norm (or masked-garbage) rows guarded to 0 instead of 0/0 NaN.
    inv_row = jnp.where(row_ss > 0.0, lax.rsqrt(row_ss), 0.0)    # EUP rsqrt

    # MXU matmul against the pre-normalized weight, f32 accumulation.
    cos = jnp.dot(x, w_ref[...], preferred_element_type=jnp.float32)  # (tm, tc)
    cos = cos * inv_row
    o_ref[...] = jnp.clip(cos, -1.0, 1.0).astype(o_ref.dtype)


# ----------------------------------------------------------------------------
# One-time weight preparation (belongs in module __init__: PEDCC centroids are
# frozen). Column-unit-normalize, pad classes to a lane-dense tile width, cast.
# ----------------------------------------------------------------------------
_WEIGHT_RESIDENT_BYTES = 20 * 1024 * 1024    # keep a fully resident weight <= ~20 MiB
_WEIGHT_TILE_BYTES = 8 * 1024 * 1024         # per-block cap when tiling over classes


def prepare_pedcc_weight(w, *, use_bf16: bool = True):
    """w: (in_features, out_features) -> (w_prep (D, c_pad), tc)."""
    d, c = w.shape
    w_bytes = 2 if use_bf16 else 4

    c128 = _round_up(c, 128)
    if d * c128 * w_bytes <= _WEIGHT_RESIDENT_BYTES:
        tc = c128                                   # whole class axis in one block
    else:
        tc = max(256, (_WEIGHT_TILE_BYTES // (d * w_bytes)) // 256 * 256)
        tc = min(tc, c128)
    c_pad = _round_up(c, tc)

    w32 = w.astype(jnp.float32)
    col_ss = jnp.sum(w32 * w32, axis=0, keepdims=True)
    # The renorm scale cancels in the cosine; zero-norm columns (only the padded
    # ones in practice) are guarded to 0 instead of the NaN PyTorch would give.
    inv_col = jnp.where(col_ss > 0.0, lax.rsqrt(col_ss), 0.0)
    w_prep = jnp.pad(w32 * inv_col, ((0, 0), (0, c_pad - c)))
    if use_bf16:
        w_prep = w_prep.astype(jnp.bfloat16)
    return w_prep, tc


# ----------------------------------------------------------------------------
# Wrappers.
# ----------------------------------------------------------------------------
def cosine_linear_pedcc_prepared(x, w_prep, out_features, tc, *,
                                 block_n: int = 512, use_bf16: bool = True,
                                 out_dtype=jnp.float32):
    n, d = x.shape
    d2, c_pad = w_prep.shape
    assert d == d2, (d, d2)
    c = out_features
    assert c_pad % tc == 0 and c_pad >= c

    op_dtype = jnp.bfloat16 if use_bf16 else jnp.float32
    x_p = x.astype(op_dtype)                 # wrapper-side cast: half HBM/VMEM bytes
    x_bytes = 2 if use_bf16 else 4
    out_bytes = jnp.dtype(out_dtype).itemsize

    c_tiles = c_pad // tc
    resident_w = (c_tiles == 1)
    w_bufs = 1 if resident_w else 2          # Buffered(1) when the block is constant

    # Row tile: large (amortize ~0.35us/step, feed the MXU), bounded by a VMEM
    # budget safe on every generation (v7x physical VMEM is 64 MiB per TC).
    vmem_budget = 44 * 1024 * 1024
    w_block_bytes = w_bufs * d * tc * x_bytes
    per_row_bytes = 2 * d * x_bytes + 2 * tc * out_bytes     # double-buffered x / out
    tm_max = max(8, ((vmem_budget - w_block_bytes - (4 << 20)) // per_row_bytes) // 8 * 8)
    tm = min(block_n, _round_up(n, 8), tm_max)
    if tm >= 256:
        tm = (tm // 256) * 256               # MXU-aligned row tiles on v6e/v7x
    n_tiles = pl.cdiv(n, tm)

    if resident_w:
        # Constant index_map -> fetched once; single buffer halves its residency.
        w_spec = pl.BlockSpec((d, tc), lambda i, j: (0, j),
                              pipeline_mode=pl.Buffered(1))
    else:
        w_spec = pl.BlockSpec((d, tc), lambda i, j: (0, j))

    est_vmem = w_block_bytes + tm * per_row_bytes + (4 << 20)
    vmem_limit = min(max(est_vmem, 32 << 20), 48 << 20)      # <=48 MiB: v7x-safe

    out = pl.pallas_call(
        _cosine_kernel,
        out_shape=jax.ShapeDtypeStruct((n, c_pad), out_dtype),
        grid=(n_tiles, c_tiles),
        in_specs=[
            pl.BlockSpec((tm, d), lambda i, j: (i, 0)),      # x row tile
            w_spec,                                          # pre-normalized weight
        ],
        out_specs=pl.BlockSpec((tm, tc), lambda i, j: (i, j)),
        compiler_params=pltpu.CompilerParams(
            dimension_semantics=("parallel", "parallel"),    # megacore-shardable
            vmem_limit_bytes=vmem_limit,
        ),
    )(x_p, w_prep)

    return out if c_pad == c else out[:, :c]


def cosine_linear_pedcc(x, w, *, block_n: int = 512, use_bf16: bool = True,
                        out_dtype=jnp.float32):
    """x: (N, in_features), w: (in_features, out_features) -> (N, out_features)."""
    n, d = x.shape
    d2, c = w.shape
    assert d == d2, (d, d2)
    w_prep, tc = prepare_pedcc_weight(w, use_bf16=use_bf16)
    return cosine_linear_pedcc_prepared(x, w_prep, c, tc, block_n=block_n,
                                        use_bf16=use_bf16, out_dtype=out_dtype)


# ----------------------------------------------------------------------------
# Reference (faithful port of the PyTorch forward, renorm path) for validation.
# ----------------------------------------------------------------------------
def _reference(x, w):
    col_norm = jnp.sqrt(jnp.sum(w * w, axis=0, keepdims=True))
    scale = jnp.where(col_norm > 1e-5, 1e-5 / (col_norm + 1e-7), 1.0)
    ww = w * (scale * 1e5)
    xlen = jnp.sqrt(jnp.sum(x * x, axis=1, keepdims=True))
    wlen = jnp.sqrt(jnp.sum(ww * ww, axis=0, keepdims=True))
    cos = (x @ ww) / xlen / wlen
    return jnp.clip(cos, -1.0, 1.0)


if __name__ == "__main__":
    key = jax.random.PRNGKey(0)
    kx, kw, kx2, kw2 = jax.random.split(key, 4)

    # Case 1: module-consistent small shapes (N=8 samples, 32 features, 16 classes).
    # TODO(synk): the real module loads frozen PEDCC centroids via read_pkl();
    # a deterministic synthetic weight is used in-script instead.
    N, D, C = 8, 32, 16
    x = jax.random.normal(kx, (N, D), dtype=jnp.float32)
    limit = (6.0 / (D + C)) ** 0.5
    w = jax.random.uniform(kw, (D, C), minval=-limit, maxval=limit, dtype=jnp.float32)
    ref = _reference(x, w)

    out = jax.block_until_ready(cosine_linear_pedcc(x, w))           # bf16 default
    assert out.shape == (N, C) and out.dtype == jnp.float32
    assert jnp.allclose(out, ref, atol=5e-2, rtol=5e-2), "bf16 path mismatch"

    out_f32 = jax.block_until_ready(cosine_linear_pedcc(x, w, use_bf16=False))
    assert jnp.allclose(out_f32, ref, atol=1e-5, rtol=1e-5), "f32 path mismatch"

    # Case 2: exercises the unpadded-N boundary tile (N % 8 != 0) and class
    # padding (C not a multiple of 128) with masked boundary stores.
    N2, D2, C2 = 37, 64, 200
    x2 = jax.random.normal(kx2, (N2, D2), dtype=jnp.float32)
    w2 = jax.random.normal(kw2, (D2, C2), dtype=jnp.float32)
    ref2 = _reference(x2, w2)
    out2 = jax.block_until_ready(cosine_linear_pedcc(x2, w2))
    assert out2.shape == (N2, C2)
    assert jnp.allclose(out2, ref2, atol=5e-2, rtol=5e-2), "boundary case mismatch"

    print("KERNEL_OK")
</pallas_src>

<mosaic_0001>
module attributes {stable_mosaic.version = 11 : i64} {
  func.func @_cosine_kernel(%arg0: i32, %arg1: i32, %arg2: memref<8x32xbf16, #tpu.memory_space<vmem>>, %arg3: memref<32x128xbf16, #tpu.memory_space<vmem>>, %arg4: memref<8x128xf32, #tpu.memory_space<vmem>>) attributes {dimension_semantics = [#tpu.dimension_semantics<parallel>, #tpu.dimension_semantics<parallel>], iteration_bounds = array<i64: 1, 1>, scalar_prefetch = 0 : i64, scratch_operands = 0 : i64, tpu.core_type = #tpu.core_type<tc>, window_params = [{transform_indices = @transform_0, window_bounds = array<i64: 8, 32>}, {pipeline_mode = #tpu.pipeline_mode<synchronous>, transform_indices = @transform_1, window_bounds = array<i64: 32, 128>}, {transform_indices = @transform_2, window_bounds = array<i64: 8, 128>}]} {
    %c0 = arith.constant 0 : index
    %c0_0 = arith.constant 0 : index
    %0 = vector.load %arg2[%c0, %c0_0] : memref<8x32xbf16, #tpu.memory_space<vmem>>, vector<8x32xbf16>
    %1 = arith.extf %0 : vector<8x32xbf16> to vector<8x32xf32>
    %2 = arith.mulf %1, %1 : vector<8x32xf32>
    %cst = arith.constant dense<0.000000e+00> : vector<8xf32>
    %3 = vector.multi_reduction <add>, %2, %cst [1] : vector<8x32xf32> to vector<8xf32>
    %4 = vector.shape_cast %3 : vector<8xf32> to vector<8x1xf32>
    %cst_1 = arith.constant 0.000000e+00 : f32
    %5 = vector.broadcast %cst_1 : f32 to vector<8x1xf32>
    %6 = arith.cmpf ogt, %4, %5 : vector<8x1xf32>
    %7 = math.rsqrt %4 : vector<8x1xf32>
    %cst_2 = arith.constant 0.000000e+00 : f32
    %8 = vector.broadcast %cst_2 : f32 to vector<8x1xf32>
    %9 = arith.select %6, %7, %8 : vector<8x1xi1>, vector<8x1xf32>
    %c0_3 = arith.constant 0 : index
    %c0_4 = arith.constant 0 : index
    %10 = vector.load %arg3[%c0_3, %c0_4] : memref<32x128xbf16, #tpu.memory_space<vmem>>, vector<32x128xbf16>
    %cst_5 = arith.constant dense<0.000000e+00> : vector<8x128xf32>
    %11 = tpu.matmul %0, %10, %cst_5 {dimension_numbers = #tpu.dot_dimension_numbers<[1], [0], [0], [1], [0, 0, 1, 1], [], []>} : vector<8x32xbf16>, vector<32x128xbf16>, vector<8x128xf32> -> vector<8x128xf32>
    %12 = vector.broadcast %9 : vector<8x1xf32> to vector<8x128xf32>
    %13 = arith.mulf %11, %12 : vector<8x128xf32>
    %cst_6 = arith.constant -1.000000e+00 : f32
    %cst_7 = arith.constant 1.000000e+00 : f32
    %14 = vector.broadcast %cst_6 : f32 to vector<8x128xf32>
    %15 = arith.maximumf %14, %13 : vector<8x128xf32>
    %16 = vector.broadcast %cst_7 : f32 to vector<8x128xf32>
    %17 = arith.minimumf %16, %15 : vector<8x128xf32>
    %c0_8 = arith.constant 0 : index
    %c0_9 = arith.constant 0 : index
    %18 = vector.load %arg4[%c0_8, %c0_9] : memref<8x128xf32, #tpu.memory_space<vmem>>, vector<8x128xf32>
    tpu.vector_store %arg4[%c0_8, %c0_9], %17 {strides = array<i32>} : memref<8x128xf32, #tpu.memory_space<vmem>>, vector<8x128xf32>,
    return
  }
  func.func @transform_0(%arg0: i32, %arg1: i32) -> (i32, i32) {
    %c0_i32 = arith.constant 0 : i32
    %c0_i32_0 = arith.constant 0 : i32
    return %arg0, %c0_i32 : i32, i32
  }
  func.func @transform_1(%arg0: i32, %arg1: i32) -> (i32, i32) {
    %c0_i32 = arith.constant 0 : i32
    %c0_i32_0 = arith.constant 0 : i32
    return %c0_i32, %arg1 : i32, i32
  }
  func.func @transform_2(%arg0: i32, %arg1: i32) -> (i32, i32) {
    %c0_i32 = arith.constant 0 : i32
    return %arg0, %arg1 : i32, i32
  }
}

</mosaic_0001>

<llo_original>
// kernel: tpu_custom_call.1
$region0: #{tpu_custom_call.1}
  #allocation0 [shape = 'u32[]', space=smem, size = 0x4, offset = 0x4, fixed_abs, tag = 'smem constant byte address 0x4 - core index']
  #allocation1 [shape = 'u32[72,128]{1,0:T(1,128)}', space=vmem, size = 0x9000, scoped, tag = 'internal scratch']
  %s0 = inlined_call_operand.hbm [shape: bf16[8,32], index: 0, kind: input, shape index: {}]
  %s1 = inlined_call_operand.hbm [shape: bf16[32,128], index: 1, kind: input, shape index: {}]
  %s2 = inlined_call_operand.hbm [shape: f32[8,128], index: 2, kind: output, shape index: {}]
  %s3 = sld [smem:[#allocation0]]
  $region26: #{tpu_custom_call.1} parent=0
    _
  %s5 = ssub.s32 1, %s3
  %s6 = scalar_select 0, %s5, %s3
  $region1: #{tpu_custom_call.1} parent=0
    #allocation2 [shape = 'u8[2048]{0}', space=vmem, size = 0x800, scoped, tag = 'input window, operand 0, single buffered']
    #allocation3 [shape = 's32[1]{0}', space=sflag, size = 0x4, scoped, tag = 'scoped memory for tpu_custom_call.1']
    #allocation4 [shape = 's32[1]{0}', space=sflag, size = 0x4, scoped, tag = 'scoped memory for tpu_custom_call.1']
    #allocation5 [shape = 'u8[8192]{0}', space=vmem, size = 0x2000, scoped, tag = 'input window, operand 1, single buffered']
    #allocation6 [shape = 's32[1]{0}', space=sflag, size = 0x4, scoped, tag = 'scoped memory for tpu_custom_call.1']
    #allocation7 [shape = 'u8[4096]{0}', space=vmem, size = 0x1000, scoped, tag = 'output window, operand 0, single buffered']
    %7 = vsyncpa [#allocation3], 0
    %8 = vsyncpa [#allocation6], 0
    %9 = vsyncpa [#allocation4], 0
    // Predicated region
    $region2: #{tpu_custom_call.1} parent=1 // pred_check
      _
    $region3: #{tpu_custom_call.1} parent=1 // pred_check_branch
      %11 = sbr.rel (0) target = $region5
    $region4: #{tpu_custom_call.1} parent=1 // pred_region
      %13 = vsyncadd [#allocation3], 0
      %s15 = sshll.u32 %s0, 4
      %s16 = int_to_ptr.hbm [resolvable:$true] %s15
      %s17 = sshll.u32 [#allocation2], 4
      %s18 = int_to_ptr.vmem [resolvable:$true] %s17
      %20 = dma.hbm_to_vmem [thread:$0]  %s16, 64, %s18, [#allocation3]
    $region5: #{tpu_custom_call.1} parent=1 // pred_fallthru
      _
    // Predicated region
    $region6: #{tpu_custom_call.1} parent=1 // pred_check
      _
    $region7: #{tpu_custom_call.1} parent=1 // pred_check_branch
      %22 = sbr.rel (0) target = $region9
    $region8: #{tpu_custom_call.1} parent=1 // pred_region
      %24 = vsyncadd [#allocation6], 0
      %s25 = sshll.u32 %s1, 4
      %s26 = int_to_ptr.hbm [resolvable:$true] %s25
      %s27 = sshll.u32 [#allocation5], 4
      %s28 = int_to_ptr.vmem [resolvable:$true] %s27
      %33 = dma.hbm_to_vmem [thread:$0]  %s26, 256, %s28, [#allocation6], 64, 64, 4
    $region9: #{tpu_custom_call.1} parent=1 // pred_fallthru
      _
    // Predicated region
    $region10: #{tpu_custom_call.1} parent=1 // pred_check
      _
    $region11: #{tpu_custom_call.1} parent=1 // pred_check_branch
      %35 = sbr.rel (0) target = $region13
    $region12: #{tpu_custom_call.1} parent=1 // pred_region
      %37 = dma.done [#allocation3], 64
    $region13: #{tpu_custom_call.1} parent=1 // pred_fallthru
      _
    // Predicated region
    $region14: #{tpu_custom_call.1} parent=1 // pred_check
      _
    $region15: #{tpu_custom_call.1} parent=1 // pred_check_branch
      %39 = sbr.rel (0) target = $region17
    $region16: #{tpu_custom_call.1} parent=1 // pred_region
      %41 = dma.done [#allocation6], 256
    $region17: #{tpu_custom_call.1} parent=1 // pred_fallthru
      _
    %v43 = vld [vmem:[#allocation2] sm:$0xf]
    %v44 = vunpack.c.l.bf16 %v43
    %v45 = vmul.f32 %v44, %v44
    %vm46 = vcmask 261120
    %v47 = vsel %vm46, %v45, 0.0
    %48 = vadd.xlane.f32.xlu0 %v47
    %v49 = vpop.xlane.xlu0 %48
    %vm50 = vcmp.gt.f32.partialorder %v49, 0.0
    %v51 = vrsqrt.pop %v49
    %v52 = vmul.f32 %v51, %v49
    %v53 = vmul.f32 %v52, %v51
    %v54 = vmul.f32 0.5, %v53
    %v55 = vsub.f32 1.5, %v54
    %v56 = vmul.f32 %v51, %v55
    %vm57 = vweird.f32 %v49
    %vm58 = vweird.f32 %v51
    %vm59 = vmor %vm57, %vm58
    %v60 = vsel %vm59, %v51, %v56
    %v61 = vsel %vm50, %v60, 0.0
    %v62 = vld [vmem:[#allocation5] sm:$0xf]
    %v63 = vld [vmem:[#allocation5 + $0x4] sm:$0xf]
    %v64 = vld [vmem:[#allocation5 + $0x8] sm:$0xf]
    %v65 = vld [vmem:[#allocation5 + $0xc] sm:$0xf]
    %v70 = vunpack.c.l.b16 %v62
    %v71 = vunpack.c.l.b16 %v63
    %v72 = vunpack.c.l.b16 %v64
    %v73 = vunpack.c.l.b16 %v65
    %v74 = vpack.c.b16 %v71, %v70
    %v75 = vpack.c.b16 %v73, %v72
    %v79 = vsel %vm46, %v43, 0
    %81 = vmatpush.bf16.msra.mxu0 0
    %82 = vmatpush.bf16.msra.mxu0 0
    %83 = vmatpush.bf16.msra.mxu0 0
    %84 = vmatpush.bf16.msra.mxu0 0
    %85 = vmatpush.bf16.msra.mxu0 0
    %86 = vmatpush.bf16.msra.mxu0 0
    %87 = vmatpush.bf16.msra.mxu0 %v75
    %88 = vmatpush.bf16.msra.mxu0 %v74
    %89 = vmatmul.bf16.gmra.mxu0 %v79
    %v90 = vpop.f32.mrf.mxu0
    %v91 = vadd.f32 0.0, %v90
    %v92 = vpop.f32.mrf.mxu0
    %93 = vdwg.mxu0
    %v94 = vmul.f32 %v91, %v61
    %v95 = vmax.f32 %v94, -1.0
    %v96 = vmin.f32 %v95, 1.0
    %97 = vst [vmem:[#allocation7] sm:$0xff] %v96
    // Predicated region
    $region18: #{tpu_custom_call.1} parent=1 // pred_check
      _
    $region19: #{tpu_custom_call.1} parent=1 // pred_check_branch
      %99 = sbr.rel (0) target = $region21
    $region20: #{tpu_custom_call.1} parent=1 // pred_region
      %101 = vsyncadd [#allocation4], 0
      %s103 = sshll.u32 [#allocation7], 4
      %s104 = int_to_ptr.vmem [resolvable:$true] %s103
      %s105 = sshll.u32 %s2, 4
      %s106 = int_to_ptr.hbm [resolvable:$true] %s105
      %108 = dma.vmem_to_hbm [thread:$0]  %s104, 128, %s106, [#allocation4]
    $region21: #{tpu_custom_call.1} parent=1 // pred_fallthru
      _
    // Predicated region
    $region22: #{tpu_custom_call.1} parent=1 // pred_check
      _
    $region23: #{tpu_custom_call.1} parent=1 // pred_check_branch
      %110 = sbr.rel (0) target = $region25
    $region24: #{tpu_custom_call.1} parent=1 // pred_region
      %112 = dma.done [#allocation4], 128
    $region25: #{tpu_custom_call.1} parent=1 // pred_fallthru
      _
    %113 = vsyncpa [#allocation3], 1
    %114 = vsyncpa [#allocation6], 1
    %115 = vsyncpa [#allocation4], 1

</llo_original>
